<compile_context>
chip_gen: v7x
topology: tpu7x:2x2x1
jax: 0.10.0
libtpu: 0.0.40
codegen_flags: <defaults>
</compile_context>

<pallas_src>
import math

import jax
import jax.numpy as jnp
from jax.experimental import pallas as pl
from jax.experimental.pallas import tpu as pltpu


def _round_up(x: int, m: int) -> int:
    return ((x + m - 1) // m) * m


def _cross_attn_kernel(q_ref, k_ref, v_ref, wqk_ref, wvo_ref, o_ref):
    """TB batch rows per grid step.

    q_ref:   (TB, D)     target queries (M=1 squeezed in the wrapper)
    k_ref:   (TB, N, D)  keys   = encoded_xi
    v_ref:   (TB, N, D)  values = encoded_x
    wqk_ref: (D, D)      Wq @ Wk^T * (1/sqrt(D))   (fused, scale folded in)
    wvo_ref: (D, D)      Wv @ Wo                   (fused)
    o_ref:   (TB, D)
    """
    f32 = jnp.float32
    q = q_ref[...]
    k = k_ref[...].astype(f32)
    v = v_ref[...].astype(f32)
    wqk = wqk_ref[...]
    wvo = wvo_ref[...]

    # Dense (TB, D) @ (D, D) matmul on the MXU (all TB query rows at once).
    qh = jnp.dot(q, wqk, preferred_element_type=f32)                # (TB, D)

    # scores[b, n] = sum_d qh[b, d] * k[b, n, d]
    # Per-batch contraction has M=1, so keep it off the MXU: broadcast-mul on the
    # VPU + lane reduce on the XLU.  No explicit (N, D) -> (D, N) key transpose.
    scores = jnp.sum(qh[:, None, :] * k, axis=-1)                   # (TB, N)

    # Softmax over the N context points — f32 math, reciprocal on the EUP.
    m = jnp.max(scores, axis=-1, keepdims=True)
    e = jnp.exp(scores - m)
    inv_denom = pl.reciprocal(jnp.sum(e, axis=-1, keepdims=True), approx=True)
    attn = e * inv_denom                                            # (TB, N)

    # ctx[b, d] = sum_n attn[b, n] * v[b, n, d]   (VPU mul + sublane reduce)
    ctx = jnp.sum(attn[:, :, None] * v, axis=1)                     # (TB, D)

    # Dense (TB, D) @ (D, D) output projection on the MXU.
    out = jnp.dot(ctx.astype(wvo.dtype), wvo, preferred_element_type=f32)
    o_ref[...] = out.astype(o_ref.dtype)


def cross_attention_agg(encoded_xi, encoded_x, target_xi, wq, wk, wv, wo,
                        *, block_b: int = 128):
    """forward(encoded_xi, encoded_x, target_xi) -> [B, D] (attender output, squeeze(1)).

    For bf16 MXU throughput / halved K-V HBM traffic, pass bf16 activations and
    weights; softmax math stays in f32 inside the kernel regardless.
    """
    B, N, D = encoded_xi.shape
    _, M, _ = target_xi.shape
    assert M == 1, "squeeze(1) in the reference implies a single target query"

    # M == 1 lets us fold the projections:
    #   scores = (q Wq)(k Wk)^T = q (Wq Wk^T) k^T
    #   out    = ((attn v) Wv) Wo = (attn v)(Wv Wo)
    # This removes the N*D^2 key/value projections and halves resident weights.
    scale = 1.0 / math.sqrt(D)
    w_qk = (wq @ wk.T) * scale              # (D, D), scale folded in
    w_vo = wv @ wo                          # (D, D)

    q2d = target_xi[:, 0, :]                # (B, D)

    # Batch tile: multiple of 8 sublanes, capped at block_b (128 fills the v5e MXU;
    # pass block_b=256 on v6e/v7x for full MXU width when B is large enough).
    tb = max(8, (min(block_b, _round_up(B, 8)) // 8) * 8)
    b_pad = _round_up(B, tb)
    if b_pad != B:
        pad = b_pad - B
        q2d = jnp.pad(q2d, ((0, pad), (0, 0)))
        encoded_xi = jnp.pad(encoded_xi, ((0, pad), (0, 0), (0, 0)))
        encoded_x = jnp.pad(encoded_x, ((0, pad), (0, 0), (0, 0)))

    grid = (b_pad // tb,)

    # NOTE: for best store efficiency D should ideally be a multiple of 128
    # (lane-dense vst); D equal to the full hidden dim is still legal for any D.
    # (optional) pipeline_mode=pl.Buffered(1) on the weight specs would single-buffer
    # the constant-index (D, D) weights to save further VMEM on v7x.
    out = pl.pallas_call(
        _cross_attn_kernel,
        out_shape=jax.ShapeDtypeStruct((b_pad, D), encoded_x.dtype),
        grid_spec=pltpu.PrefetchScalarGridSpec(
            num_scalar_prefetch=0,
            grid=grid,
            in_specs=[
                pl.BlockSpec((tb, D), lambda b: (b, 0)),         # queries  (B, D)
                pl.BlockSpec((tb, N, D), lambda b: (b, 0, 0)),   # keys     = encoded_xi
                pl.BlockSpec((tb, N, D), lambda b: (b, 0, 0)),   # values   = encoded_x
                pl.BlockSpec((D, D), lambda b: (0, 0)),          # W_qk (fused, scaled)
                pl.BlockSpec((D, D), lambda b: (0, 0)),          # W_vo (fused)
            ],
            out_specs=pl.BlockSpec((tb, D), lambda b: (b, 0)),
        ),
        compiler_params=pltpu.CompilerParams(
            dimension_semantics=("parallel",),   # megacore-shardable batch axis (v7x)
            # Explicit scoped-VMEM limit: above the 16/32 MiB defaults (v5e/v6e) so a
            # large TB tile fits, below v7x's 64 MiB physical VMEM.
            vmem_limit_bytes=48 * 1024 * 1024,
        ),
    )(q2d, encoded_xi, encoded_x, w_qk, w_vo)

    return out[:B]


def _reference(encoded_xi, encoded_x, target_xi, wq, wk, wv, wo):
    """Pure-JAX reference of the same (unfused) attender for a sanity check."""
    qp = target_xi @ wq          # (B, 1, D)
    kp = encoded_xi @ wk         # (B, N, D)
    vp = encoded_x @ wv          # (B, N, D)
    scale = 1.0 / math.sqrt(qp.shape[-1])
    scores = jnp.einsum("bmd,bnd->bmn", qp, kp) * scale
    attn = jax.nn.softmax(scores, axis=-1)
    ctx = jnp.einsum("bmn,bnd->bmd", attn, vp)
    out = ctx @ wo               # (B, 1, D)
    return out[:, 0, :]          # squeeze(1)


if __name__ == "__main__":
    B, N, M, D = 2, 8, 1, 32

    key = jax.random.PRNGKey(0)
    k_xi, k_x, k_t, k_wq, k_wk, k_wv, k_wo = jax.random.split(key, 7)

    encoded_xi = jax.random.normal(k_xi, (B, N, D), dtype=jnp.float32)  # keys
    encoded_x  = jax.random.normal(k_x,  (B, N, D), dtype=jnp.float32)  # values
    target_xi  = jax.random.normal(k_t,  (B, M, D), dtype=jnp.float32)  # query

    # Deterministic parameter init (Glorot-ish scaling).
    s = 1.0 / math.sqrt(D)
    wq = jax.random.normal(k_wq, (D, D), dtype=jnp.float32) * s
    wk = jax.random.normal(k_wk, (D, D), dtype=jnp.float32) * s
    wv = jax.random.normal(k_wv, (D, D), dtype=jnp.float32) * s
    wo = jax.random.normal(k_wo, (D, D), dtype=jnp.float32) * s

    out = cross_attention_agg(encoded_xi, encoded_x, target_xi, wq, wk, wv, wo)
    out = jax.block_until_ready(out)

    ref = _reference(encoded_xi, encoded_x, target_xi, wq, wk, wv, wo)
    assert out.shape == (B, D)
    # Tolerance accounts for the (mathematically equivalent) W_qk / W_vo fusion and
    # the approximate EUP reciprocal in the softmax normalisation.
    assert jnp.allclose(out, ref, atol=2e-3, rtol=2e-3), float(jnp.max(jnp.abs(out - ref)))

    print("KERNEL_OK")
</pallas_src>

<mosaic_0001>
module attributes {stable_mosaic.version = 11 : i64} {
  func.func @_cross_attn_kernel(%arg0: i32, %arg1: memref<8x32xf32, #tpu.memory_space<vmem>>, %arg2: memref<8x8x32xf32, #tpu.memory_space<vmem>>, %arg3: memref<8x8x32xf32, #tpu.memory_space<vmem>>, %arg4: memref<32x32xf32, #tpu.memory_space<vmem>>, %arg5: memref<32x32xf32, #tpu.memory_space<vmem>>, %arg6: memref<8x32xf32, #tpu.memory_space<vmem>>) attributes {dimension_semantics = [#tpu.dimension_semantics<parallel>], iteration_bounds = array<i64: 1>, scalar_prefetch = 0 : i64, scratch_operands = 0 : i64, tpu.core_type = #tpu.core_type<tc>, window_params = [{transform_indices = @transform_0, window_bounds = array<i64: 8, 32>}, {transform_indices = @transform_1, window_bounds = array<i64: 8, 8, 32>}, {transform_indices = @transform_2, window_bounds = array<i64: 8, 8, 32>}, {pipeline_mode = #tpu.pipeline_mode<synchronous>, transform_indices = @transform_3, window_bounds = array<i64: 32, 32>}, {pipeline_mode = #tpu.pipeline_mode<synchronous>, transform_indices = @transform_4, window_bounds = array<i64: 32, 32>}, {transform_indices = @transform_5, window_bounds = array<i64: 8, 32>}]} {
    %c0 = arith.constant 0 : index
    %c0_0 = arith.constant 0 : index
    %0 = vector.load %arg1[%c0, %c0_0] : memref<8x32xf32, #tpu.memory_space<vmem>>, vector<8x32xf32>
    %c0_1 = arith.constant 0 : index
    %c0_2 = arith.constant 0 : index
    %c0_3 = arith.constant 0 : index
    %1 = vector.load %arg2[%c0_1, %c0_2, %c0_3] : memref<8x8x32xf32, #tpu.memory_space<vmem>>, vector<8x8x32xf32>
    %c0_4 = arith.constant 0 : index
    %c0_5 = arith.constant 0 : index
    %c0_6 = arith.constant 0 : index
    %2 = vector.load %arg3[%c0_4, %c0_5, %c0_6] : memref<8x8x32xf32, #tpu.memory_space<vmem>>, vector<8x8x32xf32>
    %c0_7 = arith.constant 0 : index
    %c0_8 = arith.constant 0 : index
    %3 = vector.load %arg4[%c0_7, %c0_8] : memref<32x32xf32, #tpu.memory_space<vmem>>, vector<32x32xf32>
    %c0_9 = arith.constant 0 : index
    %c0_10 = arith.constant 0 : index
    %4 = vector.load %arg5[%c0_9, %c0_10] : memref<32x32xf32, #tpu.memory_space<vmem>>, vector<32x32xf32>
    %cst = arith.constant dense<0.000000e+00> : vector<8x32xf32>
    %5 = tpu.matmul %0, %3, %cst {dimension_numbers = #tpu.dot_dimension_numbers<[1], [0], [0], [1], [0, 0, 1, 1], [], []>} : vector<8x32xf32>, vector<32x32xf32>, vector<8x32xf32> -> vector<8x32xf32>
    %6 = vector.shape_cast %5 : vector<8x32xf32> to vector<8x1x32xf32>
    %7 = vector.broadcast %6 : vector<8x1x32xf32> to vector<8x8x32xf32>
    %8 = arith.mulf %7, %1 : vector<8x8x32xf32>
    %cst_11 = arith.constant dense<0.000000e+00> : vector<8x8xf32>
    %9 = vector.multi_reduction <add>, %8, %cst_11 [2] : vector<8x8x32xf32> to vector<8x8xf32>
    %cst_12 = arith.constant dense<0xFF800000> : vector<8xf32>
    %10 = vector.multi_reduction <maximumf>, %9, %cst_12 [1] : vector<8x8xf32> to vector<8xf32>
    %11 = vector.shape_cast %10 : vector<8xf32> to vector<8x1xf32>
    %12 = vector.broadcast %11 : vector<8x1xf32> to vector<8x8xf32>
    %13 = arith.subf %9, %12 : vector<8x8xf32>
    %14 = math.exp %13 : vector<8x8xf32>
    %cst_13 = arith.constant dense<0.000000e+00> : vector<8xf32>
    %15 = vector.multi_reduction <add>, %14, %cst_13 [1] : vector<8x8xf32> to vector<8xf32>
    %16 = vector.shape_cast %15 : vector<8xf32> to vector<8x1xf32>
    %17 = tpu.reciprocal %16 {approx = true} : vector<8x1xf32> -> vector<8x1xf32>
    %18 = vector.broadcast %17 : vector<8x1xf32> to vector<8x8xf32>
    %19 = arith.mulf %14, %18 : vector<8x8xf32>
    %20 = vector.shape_cast %19 : vector<8x8xf32> to vector<8x8x1xf32>
    %21 = vector.broadcast %20 : vector<8x8x1xf32> to vector<8x8x32xf32>
    %22 = arith.mulf %21, %2 : vector<8x8x32xf32>
    %cst_14 = arith.constant dense<0.000000e+00> : vector<8x32xf32>
    %23 = vector.multi_reduction <add>, %22, %cst_14 [1] : vector<8x8x32xf32> to vector<8x32xf32>
    %cst_15 = arith.constant dense<0.000000e+00> : vector<8x32xf32>
    %24 = tpu.matmul %23, %4, %cst_15 {dimension_numbers = #tpu.dot_dimension_numbers<[1], [0], [0], [1], [0, 0, 1, 1], [], []>} : vector<8x32xf32>, vector<32x32xf32>, vector<8x32xf32> -> vector<8x32xf32>
    %c0_16 = arith.constant 0 : index
    %c0_17 = arith.constant 0 : index
    %25 = vector.load %arg6[%c0_16, %c0_17] : memref<8x32xf32, #tpu.memory_space<vmem>>, vector<8x32xf32>
    tpu.vector_store %arg6[%c0_16, %c0_17], %24 {strides = array<i32>} : memref<8x32xf32, #tpu.memory_space<vmem>>, vector<8x32xf32>,
    return
  }
  func.func @transform_0(%arg0: i32) -> (i32, i32) {
    %c0_i32 = arith.constant 0 : i32
    %c0_i32_0 = arith.constant 0 : i32
    return %arg0, %c0_i32 : i32, i32
  }
  func.func @transform_1(%arg0: i32) -> (i32, i32, i32) {
    %c0_i32 = arith.constant 0 : i32
    %c0_i32_0 = arith.constant 0 : i32
    %c0_i32_1 = arith.constant 0 : i32
    return %arg0, %c0_i32, %c0_i32_0 : i32, i32, i32
  }
  func.func @transform_2(%arg0: i32) -> (i32, i32, i32) {
    %c0_i32 = arith.constant 0 : i32
    %c0_i32_0 = arith.constant 0 : i32
    %c0_i32_1 = arith.constant 0 : i32
    return %arg0, %c0_i32, %c0_i32_0 : i32, i32, i32
  }
  func.func @transform_3(%arg0: i32) -> (i32, i32) {
    %c0_i32 = arith.constant 0 : i32
    %c0_i32_0 = arith.constant 0 : i32
    %c0_i32_1 = arith.constant 0 : i32
    return %c0_i32, %c0_i32_0 : i32, i32
  }
  func.func @transform_4(%arg0: i32) -> (i32, i32) {
    %c0_i32 = arith.constant 0 : i32
    %c0_i32_0 = arith.constant 0 : i32
    %c0_i32_1 = arith.constant 0 : i32
    return %c0_i32, %c0_i32_0 : i32, i32
  }
  func.func @transform_5(%arg0: i32) -> (i32, i32) {
    %c0_i32 = arith.constant 0 : i32
    %c0_i32_0 = arith.constant 0 : i32
    return %arg0, %c0_i32 : i32, i32
  }
}

</mosaic_0001>

<llo_original>
// kernel: tpu_custom_call.1
$region0: #{tpu_custom_call.1}
  #allocation0 [shape = 'u32[]', space=smem, size = 0x4, offset = 0x4, fixed_abs, tag = 'smem constant byte address 0x4 - core index']
  #allocation1 [shape = 'u32[144,128]{1,0:T(1,128)}', space=vmem, size = 0x12000, scoped, tag = 'internal scratch']
  %s0 = inlined_call_operand.hbm [shape: f32[8,32], index: 0, kind: input, shape index: {}]
  %s1 = inlined_call_operand.hbm [shape: f32[8,8,32], index: 1, kind: input, shape index: {}]
  %s2 = inlined_call_operand.hbm [shape: f32[8,8,32], index: 2, kind: input, shape index: {}]
  %s3 = inlined_call_operand.hbm [shape: f32[32,32], index: 3, kind: input, shape index: {}]
  %s4 = inlined_call_operand.hbm [shape: f32[32,32], index: 4, kind: input, shape index: {}]
  %s5 = inlined_call_operand.hbm [shape: f32[8,32], index: 5, kind: output, shape index: {}]
  %s6 = sld [smem:[#allocation0]]
  $region50: #{tpu_custom_call.1} parent=0
    _
  %s8 = ssub.s32 1, %s6
  %s9 = scalar_select 0, %s8, %s6
  $region1: #{tpu_custom_call.1} parent=0
    #allocation2 [shape = 'u8[4096]{0}', space=vmem, size = 0x1000, scoped, tag = 'input window, operand 0, single buffered']
    #allocation3 [shape = 's32[1]{0}', space=sflag, size = 0x4, scoped, tag = 'scoped memory for tpu_custom_call.1']
    #allocation4 [shape = 's32[1]{0}', space=sflag, size = 0x4, scoped, tag = 'scoped memory for tpu_custom_call.1']
    #allocation5 [shape = 'u8[32768]{0}', space=vmem, size = 0x8000, scoped, tag = 'input window, operand 1, single buffered']
    #allocation6 [shape = 's32[1]{0}', space=sflag, size = 0x4, scoped, tag = 'scoped memory for tpu_custom_call.1']
    #allocation7 [shape = 'u8[32768]{0}', space=vmem, size = 0x8000, scoped, tag = 'input window, operand 2, single buffered']
    #allocation8 [shape = 'u8[16384]{0}', space=vmem, size = 0x4000, scoped, tag = 'input window, operand 3, single buffered']
    #allocation9 [shape = 's32[1]{0}', space=sflag, size = 0x4, scoped, tag = 'scoped memory for tpu_custom_call.1']
    #allocation10 [shape = 'u8[16384]{0}', space=vmem, size = 0x4000, scoped, tag = 'input window, operand 4, single buffered']
    #allocation11 [shape = 'u8[4096]{0}', space=vmem, size = 0x1000, scoped, tag = 'output window, operand 0, single buffered']
    %10 = vsyncpa [#allocation3], 0
    %11 = vsyncpa [#allocation6], 0
    %12 = vsyncpa [#allocation9], 0
    %13 = vsyncpa [#allocation4], 0
    // Predicated region
    $region2: #{tpu_custom_call.1} parent=1 // pred_check
      _
    $region3: #{tpu_custom_call.1} parent=1 // pred_check_branch
      %15 = sbr.rel (0) target = $region5
    $region4: #{tpu_custom_call.1} parent=1 // pred_region
      %s17 = ssub.s32 128, 128
      %18 = vsyncadd [#allocation3], %s17
      %s20 = sshll.u32 [#allocation2], 4
      %s21 = int_to_ptr.vmem [resolvable:$true] %s20
      %23 = dma.hbm_to_vmem [thread:$0]  %s0, 128, %s21, [#allocation3]
    $region5: #{tpu_custom_call.1} parent=1 // pred_fallthru
      _
    // Predicated region
    $region6: #{tpu_custom_call.1} parent=1 // pred_check
      _
    $region7: #{tpu_custom_call.1} parent=1 // pred_check_branch
      %25 = sbr.rel (0) target = $region9
    $region8: #{tpu_custom_call.1} parent=1 // pred_region
      %s27 = ssub.s32 1024, 1024
      %28 = vsyncadd [#allocation6], %s27
      %s29 = sshll.u32 [#allocation5], 4
      %s30 = int_to_ptr.vmem [resolvable:$true] %s29
      %35 = dma.hbm_to_vmem [thread:$0]  %s1, 1024, %s30, [#allocation6], 128, 128, 8
    $region9: #{tpu_custom_call.1} parent=1 // pred_fallthru
      _
    // Predicated region
    $region10: #{tpu_custom_call.1} parent=1 // pred_check
      _
    $region11: #{tpu_custom_call.1} parent=1 // pred_check_branch
      %37 = sbr.rel (0) target = $region13
    $region12: #{tpu_custom_call.1} parent=1 // pred_region
      %s39 = ssub.s32 1024, 1024
      %40 = vsyncadd [#allocation6], %s39
      %s41 = sshll.u32 [#allocation7], 4
      %s42 = int_to_ptr.vmem [resolvable:$true] %s41
      %47 = dma.hbm_to_vmem [thread:$0]  %s2, 1024, %s42, [#allocation6], 128, 128, 8
    $region13: #{tpu_custom_call.1} parent=1 // pred_fallthru
      _
    // Predicated region
    $region14: #{tpu_custom_call.1} parent=1 // pred_check
      _
    $region15: #{tpu_custom_call.1} parent=1 // pred_check_branch
      %49 = sbr.rel (0) target = $region17
    $region16: #{tpu_custom_call.1} parent=1 // pred_region
      %s51 = ssub.s32 512, 512
      %52 = vsyncadd [#allocation9], %s51
      %s53 = sshll.u32 [#allocation8], 4
      %s54 = int_to_ptr.vmem [resolvable:$true] %s53
      %59 = dma.hbm_to_vmem [thread:$0]  %s3, 512, %s54, [#allocation9], 128, 128, 8
    $region17: #{tpu_custom_call.1} parent=1 // pred_fallthru
      _
    // Predicated region
    $region18: #{tpu_custom_call.1} parent=1 // pred_check
      _
    $region19: #{tpu_custom_call.1} parent=1 // pred_check_branch
      %61 = sbr.rel (0) target = $region21
    $region20: #{tpu_custom_call.1} parent=1 // pred_region
      %s63 = ssub.s32 512, 512
      %64 = vsyncadd [#allocation9], %s63
      %s65 = sshll.u32 [#allocation10], 4
      %s66 = int_to_ptr.vmem [resolvable:$true] %s65
      %71 = dma.hbm_to_vmem [thread:$0]  %s4, 512, %s66, [#allocation9], 128, 128, 8
    $region21: #{tpu_custom_call.1} parent=1 // pred_fallthru
      _
    // Predicated region
    $region22: #{tpu_custom_call.1} parent=1 // pred_check
      _
    $region23: #{tpu_custom_call.1} parent=1 // pred_check_branch
      %73 = sbr.rel (0) target = $region25
    $region24: #{tpu_custom_call.1} parent=1 // pred_region
      %74 = dma.done [#allocation3], 128
    $region25: #{tpu_custom_call.1} parent=1 // pred_fallthru
      _
    // Predicated region
    $region26: #{tpu_custom_call.1} parent=1 // pred_check
      _
    $region27: #{tpu_custom_call.1} parent=1 // pred_check_branch
      %76 = sbr.rel (0) target = $region29
    $region28: #{tpu_custom_call.1} parent=1 // pred_region
      %77 = dma.done [#allocation6], 1024
    $region29: #{tpu_custom_call.1} parent=1 // pred_fallthru
      _
    // Predicated region
    $region30: #{tpu_custom_call.1} parent=1 // pred_check
      _
    $region31: #{tpu_custom_call.1} parent=1 // pred_check_branch
      %79 = sbr.rel (0) target = $region33
    $region32: #{tpu_custom_call.1} parent=1 // pred_region
      %80 = dma.done [#allocation6], 1024
    $region33: #{tpu_custom_call.1} parent=1 // pred_fallthru
      _
    // Predicated region
    $region34: #{tpu_custom_call.1} parent=1 // pred_check
      _
    $region35: #{tpu_custom_call.1} parent=1 // pred_check_branch
      %82 = sbr.rel (0) target = $region37
    $region36: #{tpu_custom_call.1} parent=1 // pred_region
      %83 = dma.done [#allocation9], 512
    $region37: #{tpu_custom_call.1} parent=1 // pred_fallthru
      _
    // Predicated region
    $region38: #{tpu_custom_call.1} parent=1 // pred_check
      _
    $region39: #{tpu_custom_call.1} parent=1 // pred_check_branch
      %85 = sbr.rel (0) target = $region41
    $region40: #{tpu_custom_call.1} parent=1 // pred_region
      %86 = dma.done [#allocation9], 512
    $region41: #{tpu_custom_call.1} parent=1 // pred_fallthru
      _
    %v87 = vld [vmem:[#allocation2] sm:$0xff]
    %v88 = vld [vmem:[#allocation5] sm:$0xff]
    %v89 = vld [vmem:[#allocation5 + $0x8] sm:$0xff]
    %v90 = vld [vmem:[#allocation5 + $0x10] sm:$0xff]
    %v91 = vld [vmem:[#allocation5 + $0x18] sm:$0xff]
    %v92 = vld [vmem:[#allocation5 + $0x20] sm:$0xff]
    %v93 = vld [vmem:[#allocation5 + $0x28] sm:$0xff]
    %v94 = vld [vmem:[#allocation5 + $0x30] sm:$0xff]
    %v95 = vld [vmem:[#allocation5 + $0x38] sm:$0xff]
    %v96 = vld [vmem:[#allocation7] sm:$0xff]
    %v97 = vld [vmem:[#allocation7 + $0x8] sm:$0xff]
    %v98 = vld [vmem:[#allocation7 + $0x10] sm:$0xff]
    %v99 = vld [vmem:[#allocation7 + $0x18] sm:$0xff]
    %v100 = vld [vmem:[#allocation7 + $0x20] sm:$0xff]
    %v101 = vld [vmem:[#allocation7 + $0x28] sm:$0xff]
    %v102 = vld [vmem:[#allocation7 + $0x30] sm:$0xff]
    %v103 = vld [vmem:[#allocation7 + $0x38] sm:$0xff]
    %v104 = vld [vmem:[#allocation8] sm:$0xff]
    %v105 = vld [vmem:[#allocation8 + $0x8] sm:$0xff]
    %v106 = vld [vmem:[#allocation8 + $0x10] sm:$0xff]
    %v107 = vld [vmem:[#allocation8 + $0x18] sm:$0xff]
    %v108 = vld [vmem:[#allocation10] sm:$0xff]
    %v109 = vld [vmem:[#allocation10 + $0x8] sm:$0xff]
    %v110 = vld [vmem:[#allocation10 + $0x10] sm:$0xff]
    %v111 = vld [vmem:[#allocation10 + $0x18] sm:$0xff]
    %vm112 = vcmask 261120
    %v114 = vsel %vm112, %v87, 0
    %116 = vmatprep.subr.mxu0 0.0
    %117 = vmatpush1.msra.mxu0 %v104
    %118 = vmatprep.subr.mxu0 0.0
    %119 = vmatpush1.msra.mxu0 %v105
    %120 = vmatprep.subr.mxu0 0.0
    %121 = vmatpush1.msra.mxu0 %v106
    %122 = vmatprep.subr.mxu0 0.0
    %123 = vmatpush1.msra.mxu0 %v107
    %124 = vmatprep.subr.mxu0 0.0
    %125 = vmatpush1.msra.mxu0 0.0
    %126 = vmatprep.subr.mxu0 0.0
    %127 = vmatpush1.msra.mxu0 0.0
    %128 = vmatprep.subr.mxu0 0.0
    %129 = vmatpush1.msra.mxu0 0.0
    %130 = vmatprep.subr.mxu0 0.0
    %131 = vmatpush1.msra.mxu0 0.0
    %132 = vmatprep.subr.mxu0 0.0
    %133 = vmatpush1.msra.mxu0 0.0
    %134 = vmatprep.subr.mxu0 0.0
    %135 = vmatpush1.msra.mxu0 0.0
    %136 = vmatprep.subr.mxu0 0.0
    %137 = vmatpush1.msra.mxu0 0.0
    %138 = vmatprep.subr.mxu0 0.0
    %139 = vmatpush1.msra.mxu0 0.0
    %140 = vmatprep.subr.mxu0 0.0
    %141 = vmatpush1.msra.mxu0 0.0
    %142 = vmatprep.subr.mxu0 0.0
    %143 = vmatpush1.msra.mxu0 0.0
    %144 = vmatprep.subr.mxu0 0.0
    %145 = vmatpush1.msra.mxu0 0.0
    %146 = vmatprep.subr.mxu0 0.0
    %147 = vmatpush1.msra.mxu0 0.0
    %148 = vmatprep.subr.mxu0 0.0
    %149 = vmatpush1.msra.mxu0 0.0
    %150 = vmatprep.subr.mxu0 0.0
    %151 = vmatpush1.msra.mxu0 0.0
    %152 = vmatprep.subr.mxu0 0.0
    %153 = vmatpush1.msra.mxu0 0.0
    %154 = vmatprep.subr.mxu0 0.0
    %155 = vmatpush1.msra.mxu0 0.0
    %156 = vmatprep.subr.mxu0 0.0
    %157 = vmatpush1.msra.mxu0 0.0
    %158 = vmatprep.subr.mxu0 0.0
    %159 = vmatpush1.msra.mxu0 0.0
    %160 = vmatprep.subr.mxu0 0.0
    %161 = vmatpush1.msra.mxu0 0.0
    %162 = vmatprep.subr.mxu0 0.0
    %163 = vmatpush1.msra.mxu0 0.0
    %164 = vmatprep.subr.mxu0 0.0
    %165 = vmatpush1.msra.mxu0 0.0
    %166 = vmatprep.subr.mxu0 0.0
    %167 = vmatpush1.msra.mxu0 0.0
    %168 = vmatprep.subr.mxu0 0.0
    %169 = vmatpush1.msra.mxu0 0.0
    %170 = vmatprep.subr.mxu0 0.0
    %171 = vmatpush1.msra.mxu0 0.0
    %172 = vmatprep.subr.mxu0 0.0
    %173 = vmatpush1.msra.mxu0 0.0
    %174 = vmatprep.subr.mxu0 0.0
    %175 = vmatpush1.msra.mxu0 0.0
    %176 = vmatprep.subr.mxu0 0.0
    %177 = vmatpush1.msra.mxu0 0.0
    %178 = vmatprep.subr.mxu0 0.0
    %179 = vmatpush1.msra.mxu0 0.0
    %180 = vmatprep.mubr.f32.mxu0 0.0
    %181 = vmatmul.mubr.f32.gmra.mrb[0].mxu0 %v114
    %v182 = vpop.f32.mrb[0].mxu0
    %v183 = vadd.f32 0.0, %v182
    %v184 = vpop.f32.mrb[0].mxu0
    %185 = vdwg.mxu0
    %v187 = vcombine.high %v183, %v183
    %v189 = vunpack.c.l.s4 1966171168
    %v190 = vunpack.c.0.s8 %v189
    %v191 = vlaneseq
    %v192 = vshrl.u32 %v191, 7
    %v193 = vsub.s32 %v190, %v192
    %v194 = vrot.slane %v183, %v193
    %v196 = vunpack.c.l.s4 1966171168
    %v197 = vunpack.c.0.s8 %v196
    %v198 = vlaneseq
    %v199 = vshrl.u32 %v198, 7
    %v200 = vsub.s32 %v197, %v199
    %v201 = vrot.slane %v187, %v200
    %v202 = vcombine.high %v194, %v194
    %v203 = vcombine.high %v201, %v201
    %v205 = vunpack.c.l.s4 1966171168
    %v206 = vunpack.c.0.s8 %v205
    %v207 = vlaneseq
    %v208 = vshrl.u32 %v207, 7
    %v209 = vsub.s32 %v206, %v208
    %v210 = vrot.slane %v194, %v209
    %v212 = vunpack.c.l.s4 1966171168
    %v213 = vunpack.c.0.s8 %v212
    %v214 = vlaneseq
    %v215 = vshrl.u32 %v214, 7
    %v216 = vsub.s32 %v213, %v215
    %v217 = vrot.slane %v201, %v216
    %v219 = vunpack.c.l.s4 1966171168
    %v220 = vunpack.c.0.s8 %v219
    %v221 = vlaneseq
    %v222 = vshrl.u32 %v221, 7
    %v223 = vsub.s32 %v220, %v222
    %v224 = vrot.slane %v202, %v223
    %v226 = vunpack.c.l.s4 1966171168
    %v227 = vunpack.c.0.s8 %v226
    %v228 = vlaneseq
    %v229 = vshrl.u32 %v228, 7
    %v230 = vsub.s32 %v227, %v229
    %v231 = vrot.slane %v203, %v230
    %v232 = vcombine.high %v210, %v210
    %v233 = vcombine.high %v217, %v217
    %v234 = vcombine.high %v224, %v224
    %v235 = vcombine.high %v231, %v231
    %v236 = vlaneseq
    %v237 = vshrl.u32 %v236, 7
    %v238 = vsub.s32 0, %v237
    %v239 = vrot.slane %v210, %v238
    %v240 = vlaneseq
    %v241 = vshrl.u32 %v240, 7
    %v242 = vsub.s32 0, %v241
    %v243 = vrot.slane %v224, %v242
    %v244 = vlaneseq
    %v245 = vshrl.u32 %v244, 7
    %v246 = vsub.s32 0, %v245
    %v247 = vrot.slane %v232, %v246
    %v248 = vlaneseq
    %v249 = vshrl.u32 %v248, 7
    %v250 = vsub.s32 0, %v249
    %v251 = vrot.slane %v234, %v250
    %v252 = vlaneseq
    %v253 = vshrl.u32 %v252, 7
    %v254 = vsub.s32 0, %v253
    %v255 = vrot.slane %v217, %v254
    %v256 = vlaneseq
    %v257 = vshrl.u32 %v256, 7
    %v258 = vsub.s32 0, %v257
    %v259 = vrot.slane %v231, %v258
    %v260 = vlaneseq
    %v261 = vshrl.u32 %v260, 7
    %v262 = vsub.s32 0, %v261
    %v263 = vrot.slane %v233, %v262
    %v264 = vlaneseq
    %v265 = vshrl.u32 %v264, 7
    %v266 = vsub.s32 0, %v265
    %v267 = vrot.slane %v235, %v266
    %v276 = vmul.f32 %v239, %v88
    %v277 = vmul.f32 %v243, %v89
    %v278 = vmul.f32 %v247, %v90
    %v279 = vmul.f32 %v251, %v91
    %v280 = vmul.f32 %v255, %v92
    %v281 = vmul.f32 %v259, %v93
    %v282 = vmul.f32 %v263, %v94
    %v283 = vmul.f32 %v267, %v95
    %v284 = vsel %vm112, %v276, 0.0
    %285 = vadd.xlane.f32.xlu0 %v284
    %v286 = vpop.xlane.xlu0 %285
    %v287 = vsel %vm112, %v277, 0.0
    %288 = vadd.xlane.f32.xlu0 %v287
    %v289 = vpop.xlane.xlu0 %288
    %v290 = vsel %vm112, %v278, 0.0
    %291 = vadd.xlane.f32.xlu0 %v290
    %v292 = vpop.xlane.xlu0 %291
    %v293 = vsel %vm112, %v279, 0.0
    %294 = vadd.xlane.f32.xlu0 %v293
    %v295 = vpop.xlane.xlu0 %294
    %v296 = vsel %vm112, %v280, 0.0
    %297 = vadd.xlane.f32.xlu0 %v296
    %v298 = vpop.xlane.xlu0 %297
    %v299 = vsel %vm112, %v281, 0.0
    %300 = vadd.xlane.f32.xlu0 %v299
    %v301 = vpop.xlane.xlu0 %300
    %v302 = vsel %vm112, %v282, 0.0
    %303 = vadd.xlane.f32.xlu0 %v302
    %v304 = vpop.xlane.xlu0 %303
    %v305 = vsel %vm112, %v283, 0.0
    %306 = vadd.xlane.f32.xlu0 %v305
    %v307 = vpop.xlane.xlu0 %306
    %v316 = vlaneseq
    %v317 = vand.u32 %v316, 127
    %v318 = vlaneseq
    %v319 = vshrl.u32 %v318, 7
    %v320 = vsub.s32 %v317, %v319
    %v321 = vrot.slane %v286, %v320
    %v322 = vlaneseq
    %v323 = vshrl.u32 %v322, 7
    %v324 = vsub.s32 %v317, %v323
    %v325 = vrot.slane %v289, %v324
    %v326 = vlaneseq
    %v327 = vshrl.u32 %v326, 7
    %v328 = vsub.s32 %v317, %v327
    %v329 = vrot.slane %v292, %v328
    %v330 = vlaneseq
    %v331 = vshrl.u32 %v330, 7
    %v332 = vsub.s32 %v317, %v331
    %v333 = vrot.slane %v295, %v332
    %v334 = vlaneseq
    %v335 = vshrl.u32 %v334, 7
    %v336 = vsub.s32 %v317, %v335
    %v337 = vrot.slane %v298, %v336
    %v338 = vlaneseq
    %v339 = vshrl.u32 %v338, 7
    %v340 = vsub.s32 %v317, %v339
    %v341 = vrot.slane %v301, %v340
    %v342 = vlaneseq
    %v343 = vshrl.u32 %v342, 7
    %v344 = vsub.s32 %v317, %v343
    %v345 = vrot.slane %v304, %v344
    %v346 = vlaneseq
    %v347 = vshrl.u32 %v346, 7
    %v348 = vsub.s32 %v317, %v347
    %v349 = vrot.slane %v307, %v348
    %vm350 = vcmask 1041409
    %v351 = vsel %vm350, %v325, %v321
    %vm352 = vcmask 1042434
    %v353 = vsel %vm352, %v329, %v351
    %vm354 = vcmask 1043459
    %v355 = vsel %vm354, %v333, %v353
    %vm356 = vcmask 1044484
    %v357 = vsel %vm356, %v337, %v355
    %vm358 = vcmask 1045509
    %v359 = vsel %vm358, %v341, %v357
    %vm360 = vcmask 1046534
    %v361 = vsel %vm360, %v345, %v359
    %vm362 = vcmask 1047559
    %v363 = vsel %vm362, %v349, %v361
    %vm365 = vcmask 64512
    %v366 = vsel %vm365, %v363, -inf
    %367 = vmax.xlane.f32.xlu0 %v366
    %v368 = vpop.xlane.xlu0 %367
    %v370 = vlaneseq
    %v371 = vshrl.u32 %v370, 7
    %v372 = vsub.s32 0, %v371
    %v373 = vrot.slane %v368, %v372
    %v374 = vlaneseq
    %v375 = vshrl.u32 %v374, 7
    %v376 = vsub.s32 1, %v375
    %v377 = vrot.slane %v368, %v376
    %v378 = vlaneseq
    %v379 = vshrl.u32 %v378, 7
    %v380 = vsub.s32 2, %v379
    %v381 = vrot.slane %v368, %v380
    %v382 = vlaneseq
    %v383 = vshrl.u32 %v382, 7
    %v384 = vsub.s32 3, %v383
    %v385 = vrot.slane %v368, %v384
    %v386 = vlaneseq
    %v387 = vshrl.u32 %v386, 7
    %v388 = vsub.s32 4, %v387
    %v389 = vrot.slane %v368, %v388
    %v390 = vlaneseq
    %v391 = vshrl.u32 %v390, 7
    %v392 = vsub.s32 5, %v391
    %v393 = vrot.slane %v368, %v392
    %v394 = vlaneseq
    %v395 = vshrl.u32 %v394, 7
    %v396 = vsub.s32 6, %v395
    %v397 = vrot.slane %v368, %v396
    %v398 = vlaneseq
    %v399 = vshrl.u32 %v398, 7
    %v400 = vsub.s32 7, %v399
    %v401 = vrot.slane %v368, %v400
    %v410 = vsub.f32 %v286, %v373
    %v411 = vsub.f32 %v289, %v377
    %v412 = vsub.f32 %v292, %v381
    %v413 = vsub.f32 %v295, %v385
    %v414 = vsub.f32 %v298, %v389
    %v415 = vsub.f32 %v301, %v393
    %v416 = vsub.f32 %v304, %v397
    %v417 = vsub.f32 %v307, %v401
    %v418 = vmul.f32 %v410, 1.442695
    %v419 = vpow.pop %v418
    %v420 = vmul.f32 %v411, 1.442695
    %v421 = vpow.pop %v420
    %v422 = vmul.f32 %v412, 1.442695
    %v423 = vpow.pop %v422
    %v424 = vmul.f32 %v413, 1.442695
    %v425 = vpow.pop %v424
    %v426 = vmul.f32 %v414, 1.442695
    %v427 = vpow.pop %v426
    %v428 = vmul.f32 %v415, 1.442695
    %v429 = vpow.pop %v428
    %v430 = vmul.f32 %v416, 1.442695
    %v431 = vpow.pop %v430
    %v432 = vmul.f32 %v417, 1.442695
    %v433 = vpow.pop %v432
    %442 = vset.pattern.permute.xlu0 0
    %443 = vperm.xlu0 %442, %v419
    %v444 = vpop.permute.xlu0 %443
    %445 = vset.pattern.permute.xlu0 0
    %446 = vperm.xlu0 %445, %v421
    %v447 = vpop.permute.xlu0 %446
    %448 = vset.pattern.permute.xlu0 0
    %449 = vperm.xlu0 %448, %v423
    %v450 = vpop.permute.xlu0 %449
    %451 = vset.pattern.permute.xlu0 0
    %452 = vperm.xlu0 %451, %v425
    %v453 = vpop.permute.xlu0 %452
    %454 = vset.pattern.permute.xlu0 0
    %455 = vperm.xlu0 %454, %v427
    %v456 = vpop.permute.xlu0 %455
    %457 = vset.pattern.permute.xlu0 0
    %458 = vperm.xlu0 %457, %v429
    %v459 = vpop.permute.xlu0 %458
    %460 = vset.pattern.permute.xlu0 0
    %461 = vperm.xlu0 %460, %v431
    %v462 = vpop.permute.xlu0 %461
    %463 = vset.pattern.permute.xlu0 0
    %464 = vperm.xlu0 %463, %v433
    %v465 = vpop.permute.xlu0 %464
    %v466 = vlaneseq
    %v467 = vshrl.u32 %v466, 7
    %v468 = vsub.s32 %v317, %v467
    %v469 = vrot.slane %v444, %v468
    %v470 = vlaneseq
    %v471 = vshrl.u32 %v470, 7
    %v472 = vsub.s32 %v317, %v471
    %v473 = vrot.slane %v447, %v472
    %v474 = vlaneseq
    %v475 = vshrl.u32 %v474, 7
    %v476 = vsub.s32 %v317, %v475
    %v477 = vrot.slane %v450, %v476
    %v478 = vlaneseq
    %v479 = vshrl.u32 %v478, 7
    %v480 = vsub.s32 %v317, %v479
    %v481 = vrot.slane %v453, %v480
    %v482 = vlaneseq
    %v483 = vshrl.u32 %v482, 7
    %v484 = vsub.s32 %v317, %v483
    %v485 = vrot.slane %v456, %v484
    %v486 = vlaneseq
    %v487 = vshrl.u32 %v486, 7
    %v488 = vsub.s32 %v317, %v487
    %v489 = vrot.slane %v459, %v488
    %v490 = vlaneseq
    %v491 = vshrl.u32 %v490, 7
    %v492 = vsub.s32 %v317, %v491
    %v493 = vrot.slane %v462, %v492
    %v494 = vlaneseq
    %v495 = vshrl.u32 %v494, 7
    %v496 = vsub.s32 %v317, %v495
    %v497 = vrot.slane %v465, %v496
    %v498 = vsel %vm350, %v473, %v469
    %v499 = vsel %vm352, %v477, %v498
    %v500 = vsel %vm354, %v481, %v499
    %v501 = vsel %vm356, %v485, %v500
    %v502 = vsel %vm358, %v489, %v501
    %v503 = vsel %vm360, %v493, %v502
    %v504 = vsel %vm362, %v497, %v503
    %v506 = vsel %vm365, %v504, 0.0
    %507 = vadd.xlane.f32.xlu0 %v506
    %v508 = vpop.xlane.xlu0 %507
    %v509 = vrcp.pop %v508
    %v511 = vlaneseq
    %v512 = vshrl.u32 %v511, 7
    %v513 = vsub.s32 0, %v512
    %v514 = vrot.slane %v509, %v513
    %v515 = vlaneseq
    %v516 = vshrl.u32 %v515, 7
    %v517 = vsub.s32 1, %v516
    %v518 = vrot.slane %v509, %v517
    %v519 = vlaneseq
    %v520 = vshrl.u32 %v519, 7
    %v521 = vsub.s32 2, %v520
    %v522 = vrot.slane %v509, %v521
    %v523 = vlaneseq
    %v524 = vshrl.u32 %v523, 7
    %v525 = vsub.s32 3, %v524
    %v526 = vrot.slane %v509, %v525
    %v527 = vlaneseq
    %v528 = vshrl.u32 %v527, 7
    %v529 = vsub.s32 4, %v528
    %v530 = vrot.slane %v509, %v529
    %v531 = vlaneseq
    %v532 = vshrl.u32 %v531, 7
    %v533 = vsub.s32 5, %v532
    %v534 = vrot.slane %v509, %v533
    %v535 = vlaneseq
    %v536 = vshrl.u32 %v535, 7
    %v537 = vsub.s32 6, %v536
    %v538 = vrot.slane %v509, %v537
    %v539 = vlaneseq
    %v540 = vshrl.u32 %v539, 7
    %v541 = vsub.s32 7, %v540
    %v542 = vrot.slane %v509, %v541
    %v551 = vmul.f32 %v419, %v514
    %v552 = vmul.f32 %v421, %v518
    %v553 = vmul.f32 %v423, %v522
    %v554 = vmul.f32 %v425, %v526
    %v555 = vmul.f32 %v427, %v530
    %v556 = vmul.f32 %v429, %v534
    %v557 = vmul.f32 %v431, %v538
    %v558 = vmul.f32 %v433, %v542
    %560 = vset.pattern.permute.xlu0 0
    %561 = vperm.xlu0 %560, %v551
    %v562 = vpop.permute.xlu0 %561
    %565 = vset.pattern.permute.xlu0 0
    %566 = vperm.xlu0 %565, %v552
    %v567 = vpop.permute.xlu0 %566
    %570 = vset.pattern.permute.xlu0 0
    %571 = vperm.xlu0 %570, %v553
    %v572 = vpop.permute.xlu0 %571
    %575 = vset.pattern.permute.xlu0 0
    %576 = vperm.xlu0 %575, %v554
    %v577 = vpop.permute.xlu0 %576
    %580 = vset.pattern.permute.xlu0 0
    %581 = vperm.xlu0 %580, %v555
    %v582 = vpop.permute.xlu0 %581
    %585 = vset.pattern.permute.xlu0 0
    %586 = vperm.xlu0 %585, %v556
    %v587 = vpop.permute.xlu0 %586
    %590 = vset.pattern.permute.xlu0 0
    %591 = vperm.xlu0 %590, %v557
    %v592 = vpop.permute.xlu0 %591
    %595 = vset.pattern.permute.xlu0 0
    %596 = vperm.xlu0 %595, %v558
    %v597 = vpop.permute.xlu0 %596
    %v599 = vmul.f32 %v562, %v96
    %v600 = vmul.f32 %v567, %v97
    %v601 = vmul.f32 %v572, %v98
    %v602 = vmul.f32 %v577, %v99
    %v603 = vmul.f32 %v582, %v100
    %v604 = vmul.f32 %v587, %v101
    %v605 = vmul.f32 %v592, %v102
    %v606 = vmul.f32 %v597, %v103
    %v607 = vsel %vm112, %v599, 0.0
    %v608 = vrot.slane %v607, 4
    %v609 = vadd.f32 %v607, %v608
    %v610 = vrot.slane %v609, 2
    %v611 = vadd.f32 %v609, %v610
    %v612 = vrot.slane %v611, 1
    %v613 = vadd.f32 %v611, %v612
    %v614 = vsel %vm112, %v600, 0.0
    %v615 = vrot.slane %v614, 4
    %v616 = vadd.f32 %v614, %v615
    %v617 = vrot.slane %v616, 2
    %v618 = vadd.f32 %v616, %v617
    %v619 = vrot.slane %v618, 1
    %v620 = vadd.f32 %v618, %v619
    %v621 = vsel %vm112, %v601, 0.0
    %v622 = vrot.slane %v621, 4
    %v623 = vadd.f32 %v621, %v622
    %v624 = vrot.slane %v623, 2
    %v625 = vadd.f32 %v623, %v624
    %v626 = vrot.slane %v625, 1
    %v627 = vadd.f32 %v625, %v626
    %v628 = vsel %vm112, %v602, 0.0
    %v629 = vrot.slane %v628, 4
    %v630 = vadd.f32 %v628, %v629
    %v631 = vrot.slane %v630, 2
    %v632 = vadd.f32 %v630, %v631
    %v633 = vrot.slane %v632, 1
    %v634 = vadd.f32 %v632, %v633
    %v635 = vsel %vm112, %v603, 0.0
    %v636 = vrot.slane %v635, 4
    %v637 = vadd.f32 %v635, %v636
    %v638 = vrot.slane %v637, 2
    %v639 = vadd.f32 %v637, %v638
    %v640 = vrot.slane %v639, 1
    %v641 = vadd.f32 %v639, %v640
    %v642 = vsel %vm112, %v604, 0.0
    %v643 = vrot.slane %v642, 4
    %v644 = vadd.f32 %v642, %v643
    %v645 = vrot.slane %v644, 2
    %v646 = vadd.f32 %v644, %v645
    %v647 = vrot.slane %v646, 1
    %v648 = vadd.f32 %v646, %v647
    %v649 = vsel %vm112, %v605, 0.0
    %v650 = vrot.slane %v649, 4
    %v651 = vadd.f32 %v649, %v650
    %v652 = vrot.slane %v651, 2
    %v653 = vadd.f32 %v651, %v652
    %v654 = vrot.slane %v653, 1
    %v655 = vadd.f32 %v653, %v654
    %v656 = vsel %vm112, %v606, 0.0
    %v657 = vrot.slane %v656, 4
    %v658 = vadd.f32 %v656, %v657
    %v659 = vrot.slane %v658, 2
    %v660 = vadd.f32 %v658, %v659
    %v661 = vrot.slane %v660, 1
    %v662 = vadd.f32 %v660, %v661
    %v671 = vsel %vm350, %v620, %v613
    %v672 = vsel %vm352, %v627, %v671
    %v673 = vsel %vm354, %v634, %v672
    %v674 = vsel %vm356, %v641, %v673
    %v675 = vsel %vm358, %v648, %v674
    %v676 = vsel %vm360, %v655, %v675
    %v677 = vsel %vm362, %v662, %v676
    %v678 = vsel %vm112, %v677, 0
    %680 = vmatprep.subr.mxu0 0.0
    %681 = vmatpush1.msra.mxu0 %v108
    %682 = vmatprep.subr.mxu0 0.0
    %683 = vmatpush1.msra.mxu0 %v109
    %684 = vmatprep.subr.mxu0 0.0
    %685 = vmatpush1.msra.mxu0 %v110
    %686 = vmatprep.subr.mxu0 0.0
    %687 = vmatpush1.msra.mxu0 %v111
    %688 = vmatprep.subr.mxu0 0.0
    %689 = vmatpush1.msra.mxu0 0.0
    %690 = vmatprep.subr.mxu0 0.0
    %691 = vmatpush1.msra.mxu0 0.0
    %692 = vmatprep.subr.mxu0 0.0
    %693 = vmatpush1.msra.mxu0 0.0
    %694 = vmatprep.subr.mxu0 0.0
    %695 = vmatpush1.msra.mxu0 0.0
    %696 = vmatprep.subr.mxu0 0.0
    %697 = vmatpush1.msra.mxu0 0.0
    %698 = vmatprep.subr.mxu0 0.0
    %699 = vmatpush1.msra.mxu0 0.0
    %700 = vmatprep.subr.mxu0 0.0
    %701 = vmatpush1.msra.mxu0 0.0
    %702 = vmatprep.subr.mxu0 0.0
    %703 = vmatpush1.msra.mxu0 0.0
    %704 = vmatprep.subr.mxu0 0.0
    %705 = vmatpush1.msra.mxu0 0.0
    %706 = vmatprep.subr.mxu0 0.0
    %707 = vmatpush1.msra.mxu0 0.0
    %708 = vmatprep.subr.mxu0 0.0
    %709 = vmatpush1.msra.mxu0 0.0
    %710 = vmatprep.subr.mxu0 0.0
    %711 = vmatpush1.msra.mxu0 0.0
    %712 = vmatprep.subr.mxu0 0.0
    %713 = vmatpush1.msra.mxu0 0.0
    %714 = vmatprep.subr.mxu0 0.0
    %715 = vmatpush1.msra.mxu0 0.0
    %716 = vmatprep.subr.mxu0 0.0
    %717 = vmatpush1.msra.mxu0 0.0
    %718 = vmatprep.subr.mxu0 0.0
    %719 = vmatpush1.msra.mxu0 0.0
    %720 = vmatprep.subr.mxu0 0.0
    %721 = vmatpush1.msra.mxu0 0.0
    %722 = vmatprep.subr.mxu0 0.0
    %723 = vmatpush1.msra.mxu0 0.0
    %724 = vmatprep.subr.mxu0 0.0
    %725 = vmatpush1.msra.mxu0 0.0
    %726 = vmatprep.subr.mxu0 0.0
    %727 = vmatpush1.msra.mxu0 0.0
    %728 = vmatprep.subr.mxu0 0.0
    %729 = vmatpush1.msra.mxu0 0.0
    %730 = vmatprep.subr.mxu0 0.0
    %731 = vmatpush1.msra.mxu0 0.0
    %732 = vmatprep.subr.mxu0 0.0
    %733 = vmatpush1.msra.mxu0 0.0
    %734 = vmatprep.subr.mxu0 0.0
    %735 = vmatpush1.msra.mxu0 0.0
    %736 = vmatprep.subr.mxu0 0.0
    %737 = vmatpush1.msra.mxu0 0.0
    %738 = vmatprep.subr.mxu0 0.0
    %739 = vmatpush1.msra.mxu0 0.0
    %740 = vmatprep.subr.mxu0 0.0
    %741 = vmatpush1.msra.mxu0 0.0
    %742 = vmatprep.subr.mxu0 0.0
    %743 = vmatpush1.msra.mxu0 0.0
    %744 = vmatprep.mubr.f32.mxu0 0.0
    %745 = vmatmul.mubr.f32.gmra.mrb[0].mxu0 %v678
    %v746 = vpop.f32.mrb[0].mxu0
    %v747 = vadd.f32 0.0, %v746
    %v748 = vpop.f32.mrb[0].mxu0
    %749 = vdwg.mxu0
    %750 = vst.msk [vmem:[#allocation11] sm:$0xff] %vm112, %v747
    // Predicated region
    $region42: #{tpu_custom_call.1} parent=1 // pred_check
      _
    $region43: #{tpu_custom_call.1} parent=1 // pred_check_branch
      %752 = sbr.rel (0) target = $region45
    $region44: #{tpu_custom_call.1} parent=1 // pred_region
      %s754 = ssub.s32 128, 128
      %755 = vsyncadd [#allocation4], %s754
      %s757 = sshll.u32 [#allocation11], 4
      %s758 = int_to_ptr.vmem [resolvable:$true] %s757
      %760 = dma.vmem_to_hbm [thread:$0]  %s758, 128, %s5, [#allocation4]
    $region45: #{tpu_custom_call.1} parent=1 // pred_fallthru
      _
    // Predicated region
    $region46: #{tpu_custom_call.1} parent=1 // pred_check
      _
    $region47: #{tpu_custom_call.1} parent=1 // pred_check_branch
      %762 = sbr.rel (0) target = $region49
    $region48: #{tpu_custom_call.1} parent=1 // pred_region
      %763 = dma.done [#allocation4], 128
    $region49: #{tpu_custom_call.1} parent=1 // pred_fallthru
      _
    %764 = vsyncpa [#allocation3], 1
    %765 = vsyncpa [#allocation6], 1
    %766 = vsyncpa [#allocation9], 1
    %767 = vsyncpa [#allocation4], 1

</llo_original>
